<compile_context>
chip_gen: v7x
topology: tpu7x:2x2x1
jax: 0.10.0
libtpu: 0.0.40
codegen_flags: <defaults>
</compile_context>

<pallas_src>
import jax
import jax.numpy as jnp
from jax.experimental import pallas as pl
from jax.experimental.pallas import tpu as pltpu

KH = KW = 4
STRIDE = 2
PAD = 1
NEG_SLOPE = 0.2
EPS = 1e-5
LANE = 128
MIB = 1024 * 1024


def _round_up(x, mult):
    return (x + mult - 1) // mult * mult


def _vmem_capacity_bytes():
    # Per-generation VMEM (128 MiB v5e/v6e, 64 MiB v7x). Conservative fallback = 64 MiB.
    try:
        return int(pltpu.get_tpu_info().vmem_capacity_bytes)
    except Exception:
        return 64 * MIB


def _pick_tiles(m, k, cout_p):
    """Derive (tm, tn, vmem_limit) from a per-generation VMEM working-set budget."""
    cap = _vmem_capacity_bytes()
    budget = cap - 24 * MIB       # working-set budget (~40 MiB on v7x, ~104 MiB on v5e/v6e)
    vmem_limit = cap - 16 * MIB   # scoped VMEM limit handed to Mosaic

    def working_set(tm, tn):
        # double-buffered bf16 patches + weights + bf16 conv-out block, plus f32 stats blocks
        return 2 * (tm * k + k * tn) * 2 + 2 * tm * tn * 2 + 4 * 8 * tn * 4

    # Lane tile: biggest of {512, 256, 128} dividing cout_p that fits. cn == 1 where possible doubles
    # arithmetic intensity and avoids re-streaming the patch buffer (key for v6e cout>=512 layers).
    tn = LANE
    for cand in (512, 256):
        if cout_p % cand == 0 and working_set(128, cand) <= budget:
            tn = cand
            break

    # M tile: biggest of {1024, 512, 256, 128} that fits (1024 on 128 MiB parts, 512 on v7x at K=8192);
    # collapse to a single block for tiny problems so no compute is wasted on padded rows.
    tm = LANE
    for cand in (1024, 512, 256, 128):
        if working_set(cand, tn) <= budget:
            tm = cand
            break
    m8 = _round_up(m, 8)
    if m8 <= tm:
        tm = m8

    return tm, tn, vmem_limit


def _conv_stats_kernel(p_ref, w_ref, y_ref, sum_ref, ssq_ref):
    # grid = (msup, cn, mn_inner); mi (the BN-stats reduction axis) is last / "arbitrary".
    @pl.when(pl.program_id(2) == 0)
    def _():
        sum_ref[...] = jnp.zeros_like(sum_ref)
        ssq_ref[...] = jnp.zeros_like(ssq_ref)

    # bf16 x bf16 -> f32 on the MXU (LeakyReLU already folded into the patch stream by the wrapper).
    y = jnp.dot(p_ref[...], w_ref[...], preferred_element_type=jnp.float32)
    y_ref[...] = y.astype(y_ref.dtype)           # bf16 intermediate (write-once/read-once)

    # Per-channel partial BatchNorm stats from the pre-cast f32 result. Accumulate into (8, tn)
    # sublane-shaped resident blocks: per-step VALU adds only; the cross-sublane reduce to (1, C)
    # happens once in the wrapper. Zero-padded rows contribute exactly zero.
    tm, tn = y.shape
    y3 = y.reshape(tm // 8, 8, tn)
    sum_ref[...] += jnp.sum(y3, axis=0)
    ssq_ref[...] += jnp.sum(y3 * y3, axis=0)


def _im2col(x_bf16, h_out, w_out):
    # Glue: patch extraction (pure indexing / layout); all heavy compute stays in the Pallas kernel.
    xp = jnp.pad(x_bf16, ((0, 0), (0, 0), (PAD, PAD), (PAD, PAD)))
    slabs = []
    for kh in range(KH):
        for kw in range(KW):
            slabs.append(xp[:, :, kh:kh + STRIDE * h_out:STRIDE, kw:kw + STRIDE * w_out:STRIDE])
    p = jnp.stack(slabs, axis=-1)                # (N, Cin, Ho, Wo, 16), t = kh*4 + kw
    p = jnp.transpose(p, (0, 2, 3, 1, 4))        # (N, Ho, Wo, Cin, 16)
    n, ho, wo, cin, kk = p.shape
    return p.reshape(n * ho * wo, cin * kk)      # (M, K) with k = ci*16 + kh*4 + kw


def unet_down_forward(x, conv_w, gamma, beta):
    n, cin, h, w = x.shape
    cout = conv_w.shape[0]
    ho, wo = h // STRIDE, w // STRIDE
    m = n * ho * wo
    k = cin * KH * KW

    cout_p = _round_up(cout, LANE)               # lane-dense output channels (no vst.msk)
    tm, tn, vmem_limit = _pick_tiles(m, k, cout_p)

    m_p = _round_up(m, tm)
    mn = m_p // tm
    cn = cout_p // tn
    # Parallel M-superblock split: gives the grid a real parallel axis even when cn == 1 so both v7x
    # TensorCores get work; partial stats per superblock are reduced (cheaply) in the wrapper.
    msup = 2 if (mn % 2 == 0 and mn >= 2) else 1
    mn_inner = mn // msup

    # LeakyReLU hoisted out of the kernel: fuses into the XLA im2col gather (4x fewer elements than the
    # old in-kernel version) and is exact because LeakyReLU(0) == 0 commutes with all zero padding.
    # bf16 halves im2col HBM traffic; MXU accumulation stays f32.
    xr = jnp.where(x > 0, x, NEG_SLOPE * x).astype(jnp.bfloat16)
    patches = _im2col(xr, ho, wo)                                   # (m, k) bf16
    patches = jnp.pad(patches, ((0, m_p - m), (0, 0)))              # zero rows -> zero conv rows
    w_mat = conv_w.reshape(cout, k).T.astype(jnp.bfloat16)          # (k, cout), same k ordering
    w_mat = jnp.pad(w_mat, ((0, 0), (0, cout_p - cout)))            # (k, cout_p)

    conv_out, psum, pssq = pl.pallas_call(
        _conv_stats_kernel,
        out_shape=(
            jax.ShapeDtypeStruct((m_p, cout_p), jnp.bfloat16),       # bf16 conv intermediate
            jax.ShapeDtypeStruct((msup * 8, cout_p), jnp.float32),   # partial channel sums
            jax.ShapeDtypeStruct((msup * 8, cout_p), jnp.float32),   # partial channel sum-of-squares
        ),
        grid=(msup, cn, mn_inner),
        in_specs=[
            pl.BlockSpec((tm, k), lambda ms, ci, mi: (ms * mn_inner + mi, 0)),
            pl.BlockSpec((k, tn), lambda ms, ci, mi: (0, ci)),
        ],
        out_specs=(
            pl.BlockSpec((tm, tn), lambda ms, ci, mi: (ms * mn_inner + mi, ci)),
            pl.BlockSpec((8, tn), lambda ms, ci, mi: (ms, ci)),      # resident accumulator across mi
            pl.BlockSpec((8, tn), lambda ms, ci, mi: (ms, ci)),      # resident accumulator across mi
        ),
        compiler_params=pltpu.CompilerParams(
            dimension_semantics=("parallel", "parallel", "arbitrary"),
            vmem_limit_bytes=vmem_limit),
    )(patches, w_mat)

    # Tiny per-channel batch-stat math (training-mode BatchNorm, biased variance). Clamp guards against
    # small negative f32 round-off in the sumsq - mean^2 form.
    ch_sum = jnp.sum(psum, axis=0)[:cout]
    ch_ssq = jnp.sum(pssq, axis=0)[:cout]
    mean = ch_sum / m
    var = jnp.maximum(ch_ssq / m - mean * mean, 0.0)
    scale = gamma.astype(jnp.float32) * jax.lax.rsqrt(var + EPS)
    shift = beta.astype(jnp.float32) - mean * scale

    # Normalize fused by XLA with the slice / reshape / NCHW transpose: one pass over the bf16
    # intermediate instead of a separate normalize kernel plus a standalone transpose.
    y = conv_out[:m, :cout].astype(jnp.float32)
    out = y * scale[None, :] + shift[None, :]
    return out.reshape(n, ho, wo, cout).transpose(0, 3, 1, 2)


if __name__ == "__main__":
    key = jax.random.PRNGKey(0)
    k1, k2, k3, k4 = jax.random.split(key, 4)

    N, Cin, H, W = 2, 4, 16, 16
    Cout = 8

    x = jax.random.normal(k1, (N, Cin, H, W), jnp.float32)
    # Conv2d(in_size, out_size, kernel_size=4, stride=2, padding=1, bias=False) weight
    fan_in = Cin * KH * KW
    bound = 1.0 / (fan_in ** 0.5)
    conv_w = jax.random.uniform(k2, (Cout, Cin, KH, KW), jnp.float32, -bound, bound)
    # BatchNorm2d affine params (PyTorch init is gamma=1, beta=0; randomized to exercise the path)
    gamma = jax.random.uniform(k3, (Cout,), jnp.float32, 0.5, 1.5)
    beta = 0.1 * jax.random.normal(k4, (Cout,), jnp.float32)

    fwd = jax.jit(unet_down_forward)
    out = jax.block_until_ready(fwd(x, conv_w, gamma, beta))

    # pure-JAX f32 reference (LeakyReLU -> conv -> BatchNorm) for a sanity check
    xr = jnp.where(x > 0, x, NEG_SLOPE * x)
    yref = jax.lax.conv_general_dilated(
        xr, conv_w, (STRIDE, STRIDE), ((PAD, PAD), (PAD, PAD)),
        dimension_numbers=("NCHW", "OIHW", "NCHW"))
    mean = yref.mean(axis=(0, 2, 3), keepdims=True)
    var = ((yref - mean) ** 2).mean(axis=(0, 2, 3), keepdims=True)
    ref = (yref - mean) * jax.lax.rsqrt(var + EPS) * gamma.reshape(1, -1, 1, 1) + beta.reshape(1, -1, 1, 1)

    assert out.shape == (N, Cout, H // STRIDE, W // STRIDE), out.shape
    assert jnp.allclose(out, ref, atol=5e-2, rtol=5e-2), float(jnp.max(jnp.abs(out - ref)))
    print("KERNEL_OK")
</pallas_src>

<mosaic_0001>
module attributes {stable_mosaic.version = 11 : i64} {
  func.func @_conv_stats_kernel(%arg0: i32, %arg1: i32, %arg2: i32, %arg3: memref<128x64xbf16, #tpu.memory_space<vmem>>, %arg4: memref<64x128xbf16, #tpu.memory_space<vmem>>, %arg5: memref<128x128xbf16, #tpu.memory_space<vmem>>, %arg6: memref<8x128xf32, #tpu.memory_space<vmem>>, %arg7: memref<8x128xf32, #tpu.memory_space<vmem>>) attributes {dimension_semantics = [#tpu.dimension_semantics<parallel>, #tpu.dimension_semantics<parallel>, #tpu.dimension_semantics<arbitrary>], iteration_bounds = array<i64: 1, 1, 1>, scalar_prefetch = 0 : i64, scratch_operands = 0 : i64, tpu.core_type = #tpu.core_type<tc>, window_params = [{transform_indices = @transform_0, window_bounds = array<i64: 128, 64>}, {transform_indices = @transform_1, window_bounds = array<i64: 64, 128>}, {transform_indices = @transform_2, window_bounds = array<i64: 128, 128>}, {transform_indices = @transform_3, window_bounds = array<i64: 8, 128>}, {transform_indices = @transform_4, window_bounds = array<i64: 8, 128>}]} {
    %c0_i32 = arith.constant 0 : i32
    %0 = arith.cmpi eq, %arg2, %c0_i32 : i32
    %1 = arith.extui %0 : i1 to i32
    %c0_i32_0 = arith.constant 0 : i32
    %2 = arith.cmpi ne, %1, %c0_i32_0 : i32
    scf.if %2 {
      %cst_16 = arith.constant 0.000000e+00 : f32
      %18 = vector.broadcast %cst_16 : f32 to vector<8x128xf32>
      %c0_17 = arith.constant 0 : index
      %c0_18 = arith.constant 0 : index
      %19 = vector.load %arg6[%c0_17, %c0_18] : memref<8x128xf32, #tpu.memory_space<vmem>>, vector<8x128xf32>
      tpu.vector_store %arg6[%c0_17, %c0_18], %18 {strides = array<i32>} : memref<8x128xf32, #tpu.memory_space<vmem>>, vector<8x128xf32>,
      %cst_19 = arith.constant 0.000000e+00 : f32
      %20 = vector.broadcast %cst_19 : f32 to vector<8x128xf32>
      %c0_20 = arith.constant 0 : index
      %c0_21 = arith.constant 0 : index
      %21 = vector.load %arg7[%c0_20, %c0_21] : memref<8x128xf32, #tpu.memory_space<vmem>>, vector<8x128xf32>
      tpu.vector_store %arg7[%c0_20, %c0_21], %20 {strides = array<i32>} : memref<8x128xf32, #tpu.memory_space<vmem>>, vector<8x128xf32>,
    } else {
    }
    %c0 = arith.constant 0 : index
    %c0_1 = arith.constant 0 : index
    %3 = vector.load %arg3[%c0, %c0_1] : memref<128x64xbf16, #tpu.memory_space<vmem>>, vector<128x64xbf16>
    %c0_2 = arith.constant 0 : index
    %c0_3 = arith.constant 0 : index
    %4 = vector.load %arg4[%c0_2, %c0_3] : memref<64x128xbf16, #tpu.memory_space<vmem>>, vector<64x128xbf16>
    %cst = arith.constant dense<0.000000e+00> : vector<128x128xf32>
    %5 = tpu.matmul %3, %4, %cst {dimension_numbers = #tpu.dot_dimension_numbers<[1], [0], [0], [1], [0, 0, 1, 1], [], []>} : vector<128x64xbf16>, vector<64x128xbf16>, vector<128x128xf32> -> vector<128x128xf32>
    %6 = arith.truncf %5 : vector<128x128xf32> to vector<128x128xbf16>
    %c0_4 = arith.constant 0 : index
    %c0_5 = arith.constant 0 : index
    %7 = vector.load %arg5[%c0_4, %c0_5] : memref<128x128xbf16, #tpu.memory_space<vmem>>, vector<128x128xbf16>
    tpu.vector_store %arg5[%c0_4, %c0_5], %6 {strides = array<i32>} : memref<128x128xbf16, #tpu.memory_space<vmem>>, vector<128x128xbf16>,
    %8 = vector.shape_cast %5 : vector<128x128xf32> to vector<16x8x128xf32>
    %c0_6 = arith.constant 0 : index
    %c0_7 = arith.constant 0 : index
    %9 = vector.load %arg6[%c0_6, %c0_7] : memref<8x128xf32, #tpu.memory_space<vmem>>, vector<8x128xf32>
    %cst_8 = arith.constant dense<0.000000e+00> : vector<8x128xf32>
    %10 = vector.multi_reduction <add>, %8, %cst_8 [0] : vector<16x8x128xf32> to vector<8x128xf32>
    %11 = arith.addf %9, %10 : vector<8x128xf32>
    %c0_9 = arith.constant 0 : index
    %c0_10 = arith.constant 0 : index
    %12 = vector.load %arg6[%c0_9, %c0_10] : memref<8x128xf32, #tpu.memory_space<vmem>>, vector<8x128xf32>
    tpu.vector_store %arg6[%c0_9, %c0_10], %11 {strides = array<i32>} : memref<8x128xf32, #tpu.memory_space<vmem>>, vector<8x128xf32>,
    %c0_11 = arith.constant 0 : index
    %c0_12 = arith.constant 0 : index
    %13 = vector.load %arg7[%c0_11, %c0_12] : memref<8x128xf32, #tpu.memory_space<vmem>>, vector<8x128xf32>
    %14 = arith.mulf %8, %8 : vector<16x8x128xf32>
    %cst_13 = arith.constant dense<0.000000e+00> : vector<8x128xf32>
    %15 = vector.multi_reduction <add>, %14, %cst_13 [0] : vector<16x8x128xf32> to vector<8x128xf32>
    %16 = arith.addf %13, %15 : vector<8x128xf32>
    %c0_14 = arith.constant 0 : index
    %c0_15 = arith.constant 0 : index
    %17 = vector.load %arg7[%c0_14, %c0_15] : memref<8x128xf32, #tpu.memory_space<vmem>>, vector<8x128xf32>
    tpu.vector_store %arg7[%c0_14, %c0_15], %16 {strides = array<i32>} : memref<8x128xf32, #tpu.memory_space<vmem>>, vector<8x128xf32>,
    return
  }
  func.func @transform_0(%arg0: i32, %arg1: i32, %arg2: i32) -> (i32, i32) {
    %c1_i32 = arith.constant 1 : i32
    %0 = arith.muli %arg0, %c1_i32 : i32
    %1 = arith.addi %0, %arg2 : i32
    %c0_i32 = arith.constant 0 : i32
    %c0_i32_0 = arith.constant 0 : i32
    return %1, %c0_i32 : i32, i32
  }
  func.func @transform_1(%arg0: i32, %arg1: i32, %arg2: i32) -> (i32, i32) {
    %c0_i32 = arith.constant 0 : i32
    %c0_i32_0 = arith.constant 0 : i32
    return %c0_i32, %arg1 : i32, i32
  }
  func.func @transform_2(%arg0: i32, %arg1: i32, %arg2: i32) -> (i32, i32) {
    %c1_i32 = arith.constant 1 : i32
    %0 = arith.muli %arg0, %c1_i32 : i32
    %1 = arith.addi %0, %arg2 : i32
    %c0_i32 = arith.constant 0 : i32
    return %1, %arg1 : i32, i32
  }
  func.func @transform_3(%arg0: i32, %arg1: i32, %arg2: i32) -> (i32, i32) {
    %c0_i32 = arith.constant 0 : i32
    return %arg0, %arg1 : i32, i32
  }
  func.func @transform_4(%arg0: i32, %arg1: i32, %arg2: i32) -> (i32, i32) {
    %c0_i32 = arith.constant 0 : i32
    return %arg0, %arg1 : i32, i32
  }
}

</mosaic_0001>

<llo_original>
// kernel: unet_down_forward.1
$region0: #{unet_down_forward.1}
  #allocation0 [shape = 'u32[]', space=smem, size = 0x4, offset = 0x4, fixed_abs, tag = 'smem constant byte address 0x4 - core index']
  #allocation1 [shape = 'u32[144,128]{1,0:T(1,128)}', space=vmem, size = 0x12000, scoped, tag = 'internal scratch']
  %s0 = inlined_call_operand.vmem [shape: bf16[128,64], index: 0, kind: input, shape index: {}]
  %s1 = inlined_call_operand.vmem [shape: bf16[64,128], index: 1, kind: input, shape index: {}]
  %s2 = inlined_call_operand.vmem [shape: bf16[128,128], index: 2, kind: output, shape index: {0}]
  %s3 = inlined_call_operand.vmem [shape: f32[8,128], index: 3, kind: output, shape index: {1}]
  %s4 = inlined_call_operand.vmem [shape: f32[8,128], index: 4, kind: output, shape index: {2}]
  %5 = xla_tuple %s2, %s3, %s4
  %s6 = sld [smem:[#allocation0]]
  $region38: #{unet_down_forward.1} parent=0
    _
  %s8 = ssub.s32 1, %s6
  %s9 = scalar_select 0, %s8, %s6
  // Predicated region
  $region2: #{unet_down_forward.1} parent=0 // pred_check
    _
  $region3: #{unet_down_forward.1} parent=0 // pred_check_branch
    %11 = sbr.rel (0) target = $region5
  $region4: #{unet_down_forward.1} parent=0 // pred_region
    %s12 = sadd.s32 0, 0
    %s13 = smul.u32 16, %s12
    %p14 = scmp.lt.s32.totalorder %s13, 15
    %s15 = scalar_select %p14, %s13, 15
    %s16 = smul.addr %s15, 4
    %s17 = scalar_lea.vmem %s0, %s16
    %s18 = sadd.s32 0, 0
    %s19 = smul.u32 16, %s18
  $region5: #{unet_down_forward.1} parent=0 // pred_fallthru
    _
  // Predicated region
  $region6: #{unet_down_forward.1} parent=0 // pred_check
    _
  $region7: #{unet_down_forward.1} parent=0 // pred_check_branch
    %21 = sbr.rel (0) target = $region9
  $region8: #{unet_down_forward.1} parent=0 // pred_region
    _
  $region9: #{unet_down_forward.1} parent=0 // pred_fallthru
    _
  %s22 = sadd.s32 0, 0
  %s23 = smul.u32 16, %s22
  %p24 = scmp.lt.s32.totalorder %s23, 15
  %s25 = scalar_select %p24, %s23, 15
  %s26 = smul.addr %s25, 4
  %s27 = scalar_lea.vmem %s0, %s26
  %s28 = sadd.s32 0, 0
  %s29 = smul.u32 16, %s28
  %p30 = scmp.lt.s32.totalorder %s29, 15
  %s31 = scalar_select %p30, %s29, 15
  %s32 = smul.addr %s31, 4
  %s33 = scalar_lea.vmem %s2, %s32
  %s34 = sadd.s32 0, 0
  %s35 = smul.u32 16, %s34
  %p36 = scmp.lt.s32.totalorder %s35, 15
  %s37 = scalar_select %p36, %s35, 15
  %s38 = smul.addr %s37, 4
  %s39 = scalar_lea.vmem %s0, %s38
  %s40 = sadd.s32 0, 0
  %s41 = smul.u32 16, %s40
  %s42 = sadd.s32 0, 0
  %s43 = smul.u32 16, %s42
  %p44 = scmp.lt.s32.totalorder %s43, 15
  %s45 = scalar_select %p44, %s43, 15
  %s46 = smul.addr %s45, 4
  %s47 = scalar_lea.vmem %s2, %s46
  %s48 = sadd.s32 0, 0
  %s49 = smul.u32 16, %s48
  %p51 = scmp.eq.s32.totalorder 0, 0
  // Predicated region
  $region10: #{unet_down_forward.1} parent=0 // pred_check
    %p52 = pneg %p51
  $region11: #{unet_down_forward.1} parent=0 // pred_check_branch
    %54 = sbr.rel (%p52) target = $region13
  $region12: #{unet_down_forward.1} parent=0 // pred_region
    %55 = vst [vmem:[%s3] sm:$0xff] 0.0
    %56 = vst [vmem:[%s4] sm:$0xff] 0.0
  $region13: #{unet_down_forward.1} parent=0 // pred_fallthru
    _
  %v57 = vld [vmem:[%s39] sm:$0xf]
  %v58 = vld [vmem:[%s39 + $0x4] sm:$0xf]
  %v59 = vld [vmem:[%s39 + $0x8] sm:$0xf]
  %v60 = vld [vmem:[%s39 + $0xc] sm:$0xf]
  %v61 = vld [vmem:[%s39 + $0x10] sm:$0xf]
  %v62 = vld [vmem:[%s39 + $0x14] sm:$0xf]
  %v63 = vld [vmem:[%s39 + $0x18] sm:$0xf]
  %v64 = vld [vmem:[%s39 + $0x1c] sm:$0xf]
  %v65 = vld [vmem:[%s39 + $0x20] sm:$0xf]
  %v66 = vld [vmem:[%s39 + $0x24] sm:$0xf]
  %v67 = vld [vmem:[%s39 + $0x28] sm:$0xf]
  %v68 = vld [vmem:[%s39 + $0x2c] sm:$0xf]
  %v69 = vld [vmem:[%s39 + $0x30] sm:$0xf]
  %v70 = vld [vmem:[%s39 + $0x34] sm:$0xf]
  %v71 = vld [vmem:[%s39 + $0x38] sm:$0xf]
  %v72 = vld [vmem:[%s39 + $0x3c] sm:$0xf]
  %v73 = vld [vmem:[%s1] sm:$0xf]
  %v74 = vld [vmem:[%s1 + $0x4] sm:$0xf]
  %v75 = vld [vmem:[%s1 + $0x8] sm:$0xf]
  %v76 = vld [vmem:[%s1 + $0xc] sm:$0xf]
  %v77 = vld [vmem:[%s1 + $0x10] sm:$0xf]
  %v78 = vld [vmem:[%s1 + $0x14] sm:$0xf]
  %v79 = vld [vmem:[%s1 + $0x18] sm:$0xf]
  %v80 = vld [vmem:[%s1 + $0x1c] sm:$0xf]
  %v97 = vunpack.c.l.b16 %v57
  %v98 = vunpack.c.l.b16 %v58
  %v99 = vunpack.c.l.b16 %v59
  %v100 = vunpack.c.l.b16 %v60
  %v101 = vunpack.c.l.b16 %v61
  %v102 = vunpack.c.l.b16 %v62
  %v103 = vunpack.c.l.b16 %v63
  %v104 = vunpack.c.l.b16 %v64
  %v105 = vunpack.c.l.b16 %v65
  %v106 = vunpack.c.l.b16 %v66
  %v107 = vunpack.c.l.b16 %v67
  %v108 = vunpack.c.l.b16 %v68
  %v109 = vunpack.c.l.b16 %v69
  %v110 = vunpack.c.l.b16 %v70
  %v111 = vunpack.c.l.b16 %v71
  %v112 = vunpack.c.l.b16 %v72
  %v113 = vpack.c.b16 %v98, %v97
  %v114 = vpack.c.b16 %v100, %v99
  %v115 = vpack.c.b16 %v102, %v101
  %v116 = vpack.c.b16 %v104, %v103
  %v117 = vpack.c.b16 %v106, %v105
  %v118 = vpack.c.b16 %v108, %v107
  %v119 = vpack.c.b16 %v110, %v109
  %v120 = vpack.c.b16 %v112, %v111
  %v129 = vunpack.c.l.b16 %v73
  %v130 = vunpack.c.l.b16 %v74
  %v131 = vunpack.c.l.b16 %v75
  %v132 = vunpack.c.l.b16 %v76
  %v133 = vunpack.c.l.b16 %v77
  %v134 = vunpack.c.l.b16 %v78
  %v135 = vunpack.c.l.b16 %v79
  %v136 = vunpack.c.l.b16 %v80
  %v137 = vpack.c.b16 %v130, %v129
  %v138 = vpack.c.b16 %v132, %v131
  %v139 = vpack.c.b16 %v134, %v133
  %v140 = vpack.c.b16 %v136, %v135
  %vm145 = vcmask 523264
  %v147 = vsel %vm145, %v113, 0
  %v150 = vsel %vm145, %v114, 0
  %v153 = vsel %vm145, %v115, 0
  %v156 = vsel %vm145, %v116, 0
  %v159 = vsel %vm145, %v117, 0
  %v162 = vsel %vm145, %v118, 0
  %v165 = vsel %vm145, %v119, 0
  %v168 = vsel %vm145, %v120, 0
  %170 = vmatprep.subr.bf16.mxu0 0
  %171 = vmatpush1.bf16.msra.mxu0 %v137
  %172 = vmatprep.subr.bf16.mxu0 0
  %173 = vmatpush1.bf16.msra.mxu0 %v138
  %174 = vmatprep.subr.bf16.mxu0 0
  %175 = vmatpush1.bf16.msra.mxu0 %v139
  %176 = vmatprep.subr.bf16.mxu0 0
  %177 = vmatpush1.bf16.msra.mxu0 %v140
  %178 = vmatprep.subr.bf16.mxu0 0
  %179 = vmatpush1.bf16.msra.mxu0 0
  %180 = vmatprep.subr.bf16.mxu0 0
  %181 = vmatpush1.bf16.msra.mxu0 0
  %182 = vmatprep.subr.bf16.mxu0 0
  %183 = vmatpush1.bf16.msra.mxu0 0
  %184 = vmatprep.subr.bf16.mxu0 0
  %185 = vmatpush1.bf16.msra.mxu0 0
  %186 = vmatprep.subr.bf16.mxu0 0
  %187 = vmatpush1.bf16.msra.mxu0 0
  %188 = vmatprep.subr.bf16.mxu0 0
  %189 = vmatpush1.bf16.msra.mxu0 0
  %190 = vmatprep.subr.bf16.mxu0 0
  %191 = vmatpush1.bf16.msra.mxu0 0
  %192 = vmatprep.subr.bf16.mxu0 0
  %193 = vmatpush1.bf16.msra.mxu0 0
  %194 = vmatprep.subr.bf16.mxu0 0
  %195 = vmatpush1.bf16.msra.mxu0 0
  %196 = vmatprep.subr.bf16.mxu0 0
  %197 = vmatpush1.bf16.msra.mxu0 0
  %198 = vmatprep.subr.bf16.mxu0 0
  %199 = vmatpush1.bf16.msra.mxu0 0
  %200 = vmatprep.subr.bf16.mxu0 0
  %201 = vmatpush1.bf16.msra.mxu0 0
  %202 = vmatprep.mubr.bf16.mxu0 0
  %203 = vmatmul.mubr.bf16.gmra.mrb[0].mxu0 %v147
  %v204 = vpop.f32.mrb[0].mxu0
  %v205 = vadd.f32 0.0, %v204
  %v206 = vpop.f32.mrb[0].mxu0
  %v207 = vpop.f32.mrb[0].mxu0
  %v208 = vadd.f32 0.0, %v207
  %v209 = vpop.f32.mrb[0].mxu0
  %210 = vmatprep.mubr.bf16.mxu0 0
  %211 = vmatmul.mubr.bf16.gmra.mrb[0].mxu0 %v150
  %v212 = vpop.f32.mrb[0].mxu0
  %v213 = vadd.f32 0.0, %v212
  %v214 = vpop.f32.mrb[0].mxu0
  %v215 = vpop.f32.mrb[0].mxu0
  %v216 = vadd.f32 0.0, %v215
  %v217 = vpop.f32.mrb[0].mxu0
  %218 = vmatprep.mubr.bf16.mxu0 0
  %219 = vmatmul.mubr.bf16.gmra.mrb[0].mxu0 %v153
  %v220 = vpop.f32.mrb[0].mxu0
  %v221 = vadd.f32 0.0, %v220
  %v222 = vpop.f32.mrb[0].mxu0
  %v223 = vpop.f32.mrb[0].mxu0
  %v224 = vadd.f32 0.0, %v223
  %v225 = vpop.f32.mrb[0].mxu0
  %226 = vmatprep.mubr.bf16.mxu0 0
  %227 = vmatmul.mubr.bf16.gmra.mrb[0].mxu0 %v156
  %v228 = vpop.f32.mrb[0].mxu0
  %v229 = vadd.f32 0.0, %v228
  %v230 = vpop.f32.mrb[0].mxu0
  %v231 = vpop.f32.mrb[0].mxu0
  %v232 = vadd.f32 0.0, %v231
  %v233 = vpop.f32.mrb[0].mxu0
  %234 = vmatprep.mubr.bf16.mxu0 0
  %235 = vmatmul.mubr.bf16.gmra.mrb[0].mxu0 %v159
  %v236 = vpop.f32.mrb[0].mxu0
  %v237 = vadd.f32 0.0, %v236
  %v238 = vpop.f32.mrb[0].mxu0
  %v239 = vpop.f32.mrb[0].mxu0
  %v240 = vadd.f32 0.0, %v239
  %v241 = vpop.f32.mrb[0].mxu0
  %242 = vmatprep.mubr.bf16.mxu0 0
  %243 = vmatmul.mubr.bf16.gmra.mrb[0].mxu0 %v162
  %v244 = vpop.f32.mrb[0].mxu0
  %v245 = vadd.f32 0.0, %v244
  %v246 = vpop.f32.mrb[0].mxu0
  %v247 = vpop.f32.mrb[0].mxu0
  %v248 = vadd.f32 0.0, %v247
  %v249 = vpop.f32.mrb[0].mxu0
  %250 = vmatprep.mubr.bf16.mxu0 0
  %251 = vmatmul.mubr.bf16.gmra.mrb[0].mxu0 %v165
  %v252 = vpop.f32.mrb[0].mxu0
  %v253 = vadd.f32 0.0, %v252
  %v254 = vpop.f32.mrb[0].mxu0
  %v255 = vpop.f32.mrb[0].mxu0
  %v256 = vadd.f32 0.0, %v255
  %v257 = vpop.f32.mrb[0].mxu0
  %258 = vmatprep.mubr.bf16.mxu0 0
  %259 = vmatmul.mubr.bf16.gmra.mrb[0].mxu0 %v168
  %v260 = vpop.f32.mrb[0].mxu0
  %v261 = vadd.f32 0.0, %v260
  %v262 = vpop.f32.mrb[0].mxu0
  %v263 = vpop.f32.mrb[0].mxu0
  %v264 = vadd.f32 0.0, %v263
  %v265 = vpop.f32.mrb[0].mxu0
  %266 = vdwg.mxu0
  %v267 = vpack.c.bf16 %v208, %v205
  %v268 = vpack.c.bf16 %v216, %v213
  %v269 = vpack.c.bf16 %v224, %v221
  %v270 = vpack.c.bf16 %v232, %v229
  %v271 = vpack.c.bf16 %v240, %v237
  %v272 = vpack.c.bf16 %v248, %v245
  %v273 = vpack.c.bf16 %v256, %v253
  %v274 = vpack.c.bf16 %v264, %v261
  %v283 = vunpack.c.l.b16 %v267
  %v284 = vunpack.c.h.b16 %v267
  %v285 = vunpack.c.l.b16 %v268
  %v286 = vunpack.c.h.b16 %v268
  %v287 = vunpack.c.l.b16 %v269
  %v288 = vunpack.c.h.b16 %v269
  %v289 = vunpack.c.l.b16 %v270
  %v290 = vunpack.c.h.b16 %v270
  %v291 = vunpack.c.l.b16 %v271
  %v292 = vunpack.c.h.b16 %v271
  %v293 = vunpack.c.l.b16 %v272
  %v294 = vunpack.c.h.b16 %v272
  %v295 = vunpack.c.l.b16 %v273
  %v296 = vunpack.c.h.b16 %v273
  %v297 = vunpack.c.l.b16 %v274
  %v298 = vunpack.c.h.b16 %v274
  %v299 = vpack.c.b16 %v283, %v283
  %v300 = vpack.c.b16 %v284, %v284
  %v301 = vpack.c.b16 %v285, %v285
  %v302 = vpack.c.b16 %v286, %v286
  %v303 = vpack.c.b16 %v287, %v287
  %v304 = vpack.c.b16 %v288, %v288
  %v305 = vpack.c.b16 %v289, %v289
  %v306 = vpack.c.b16 %v290, %v290
  %v307 = vpack.c.b16 %v291, %v291
  %v308 = vpack.c.b16 %v292, %v292
  %v309 = vpack.c.b16 %v293, %v293
  %v310 = vpack.c.b16 %v294, %v294
  %v311 = vpack.c.b16 %v295, %v295
  %v312 = vpack.c.b16 %v296, %v296
  %v313 = vpack.c.b16 %v297, %v297
  %v314 = vpack.c.b16 %v298, %v298
  %331 = vst [vmem:[%s47] sm:$0xf] %v299
  %332 = vst [vmem:[%s47 + $0x4] sm:$0xf] %v300
  %333 = vst [vmem:[%s47 + $0x8] sm:$0xf] %v301
  %334 = vst [vmem:[%s47 + $0xc] sm:$0xf] %v302
  %335 = vst [vmem:[%s47 + $0x10] sm:$0xf] %v303
  %336 = vst [vmem:[%s47 + $0x14] sm:$0xf] %v304
  %337 = vst [vmem:[%s47 + $0x18] sm:$0xf] %v305
  %338 = vst [vmem:[%s47 + $0x1c] sm:$0xf] %v306
  %339 = vst [vmem:[%s47 + $0x20] sm:$0xf] %v307
  %340 = vst [vmem:[%s47 + $0x24] sm:$0xf] %v308
  %341 = vst [vmem:[%s47 + $0x28] sm:$0xf] %v309
  %342 = vst [vmem:[%s47 + $0x2c] sm:$0xf] %v310
  %343 = vst [vmem:[%s47 + $0x30] sm:$0xf] %v311
  %344 = vst [vmem:[%s47 + $0x34] sm:$0xf] %v312
  %345 = vst [vmem:[%s47 + $0x38] sm:$0xf] %v313
  %346 = vst [vmem:[%s47 + $0x3c] sm:$0xf] %v314
  %v347 = vld [vmem:[%s3] sm:$0xff]
  %v348 = vadd.f32 %v205, %v208
  %v349 = vadd.f32 %v348, %v213
  %v350 = vadd.f32 %v349, %v216
  %v351 = vadd.f32 %v350, %v221
  %v352 = vadd.f32 %v351, %v224
  %v353 = vadd.f32 %v352, %v229
  %v354 = vadd.f32 %v353, %v232
  %v355 = vadd.f32 %v354, %v237
  %v356 = vadd.f32 %v355, %v240
  %v357 = vadd.f32 %v356, %v245
  %v358 = vadd.f32 %v357, %v248
  %v359 = vadd.f32 %v358, %v253
  %v360 = vadd.f32 %v359, %v256
  %v361 = vadd.f32 %v360, %v261
  %v362 = vadd.f32 %v361, %v264
  %v363 = vadd.f32 %v347, %v362
  %364 = vst [vmem:[%s3] sm:$0xff] %v363
  %v365 = vld [vmem:[%s4] sm:$0xff]
  %v366 = vmul.f32 %v205, %v205
  %v367 = vmul.f32 %v208, %v208
  %v368 = vmul.f32 %v213, %v213
  %v369 = vmul.f32 %v216, %v216
  %v370 = vmul.f32 %v221, %v221
  %v371 = vmul.f32 %v224, %v224
  %v372 = vmul.f32 %v229, %v229
  %v373 = vmul.f32 %v232, %v232
  %v374 = vmul.f32 %v237, %v237
  %v375 = vmul.f32 %v240, %v240
  %v376 = vmul.f32 %v245, %v245
  %v377 = vmul.f32 %v248, %v248
  %v378 = vmul.f32 %v253, %v253
  %v379 = vmul.f32 %v256, %v256
  %v380 = vmul.f32 %v261, %v261
  %v381 = vmul.f32 %v264, %v264
  %v382 = vadd.f32 %v366, %v367
  %v383 = vadd.f32 %v382, %v368
  %v384 = vadd.f32 %v383, %v369
  %v385 = vadd.f32 %v384, %v370
  %v386 = vadd.f32 %v385, %v371
  %v387 = vadd.f32 %v386, %v372
  %v388 = vadd.f32 %v387, %v373
  %v389 = vadd.f32 %v388, %v374
  %v390 = vadd.f32 %v389, %v375
  %v391 = vadd.f32 %v390, %v376
  %v392 = vadd.f32 %v391, %v377
  %v393 = vadd.f32 %v392, %v378
  %v394 = vadd.f32 %v393, %v379
  %v395 = vadd.f32 %v394, %v380
  %v396 = vadd.f32 %v395, %v381
  %v397 = vadd.f32 %v365, %v396
  %398 = vst [vmem:[%s4] sm:$0xff] %v397
  %s399 = sadd.s32 0, 0
  %s400 = smul.u32 16, %s399
  %p401 = scmp.lt.s32.totalorder %s400, 15
  %s402 = scalar_select %p401, %s400, 15
  %s403 = smul.addr %s402, 4
  %s404 = scalar_lea.vmem %s2, %s403
  // Predicated region
  $region14: #{unet_down_forward.1} parent=0 // pred_check
    _
  $region15: #{unet_down_forward.1} parent=0 // pred_check_branch
    %406 = sbr.rel (0) target = $region17
  $region16: #{unet_down_forward.1} parent=0 // pred_region
    %s407 = sadd.s32 0, 0
    %s408 = smul.u32 16, %s407
  $region17: #{unet_down_forward.1} parent=0 // pred_fallthru
    _
  // Predicated region
  $region18: #{unet_down_forward.1} parent=0 // pred_check
    _
  $region19: #{unet_down_forward.1} parent=0 // pred_check_branch
    %410 = sbr.rel (0) target = $region21
  $region20: #{unet_down_forward.1} parent=0 // pred_region
    _
  $region21: #{unet_down_forward.1} parent=0 // pred_fallthru
    _
  // Predicated region
  $region22: #{unet_down_forward.1} parent=0 // pred_check
    _
  $region23: #{unet_down_forward.1} parent=0 // pred_check_branch
    %412 = sbr.rel (0) target = $region25
  $region24: #{unet_down_forward.1} parent=0 // pred_region
    _
  $region25: #{unet_down_forward.1} parent=0 // pred_fallthru
    _
  // Predicated region
  $region26: #{unet_down_forward.1} parent=0 // pred_check
    _
  $region27: #{unet_down_forward.1} parent=0 // pred_check_branch
    %414 = sbr.rel (0) target = $region29
  $region28: #{unet_down_forward.1} parent=0 // pred_region
    %s415 = sadd.s32 0, 0
    %s416 = smul.u32 16, %s415
    %p417 = scmp.lt.s32.totalorder %s416, 15
    %s418 = scalar_select %p417, %s416, 15
    %s419 = smul.addr %s418, 4
    %s420 = scalar_lea.vmem %s2, %s419
  $region29: #{unet_down_forward.1} parent=0 // pred_fallthru
    _
  // Predicated region
  $region30: #{unet_down_forward.1} parent=0 // pred_check
    _
  $region31: #{unet_down_forward.1} parent=0 // pred_check_branch
    %422 = sbr.rel (0) target = $region33
  $region32: #{unet_down_forward.1} parent=0 // pred_region
    _
  $region33: #{unet_down_forward.1} parent=0 // pred_fallthru
    _
  // Predicated region
  $region34: #{unet_down_forward.1} parent=0 // pred_check
    _
  $region35: #{unet_down_forward.1} parent=0 // pred_check_branch
    %424 = sbr.rel (0) target = $region37
  $region36: #{unet_down_forward.1} parent=0 // pred_region
    _
  $region37: #{unet_down_forward.1} parent=0 // pred_fallthru
    _

</llo_original>
